<compile_context>
chip_gen: v5e
topology: v5e:2x2
jax: 0.10.0
libtpu: 0.0.40
codegen_flags: <defaults>
</compile_context>

<pallas_src>
import jax
import jax.numpy as jnp
from jax.experimental import pallas as pl
from jax.experimental.pallas import tpu as pltpu


# ----------------------------------------------------------------------------
# Fused Pallas kernel: x tile -> (global 1x1 conv, local 1x1 conv, folded
# fusion-head 1x1 conv -> ReLU -> sigmoid).  Channel mixing is done with
# whole-(TR, LANE)-tile scalar-broadcast FMAs on the VPU (channel counts are
# tiny); sigmoid uses EUP exp + approx reciprocal.
#
# NOTE: keep the VPU scalar-broadcast FMA formulation at these channel counts.
# If the real backbone branches land with C >= ~64 channels, switch the
# channel mixing to an MXU matmul (K padded to 128 on v5e / 256 on v6e+,
# f32 accumulation) -- an MXU call at C<=4 would waste >97% of the array.
# ----------------------------------------------------------------------------
def _student_fused_kernel(wg_ref, bg_ref, wl_ref, bl_ref, ws_ref, bs_ref,
                          x_ref, sig_ref, og_ref, ol_ref):
    # wg/wl : SMEM [C_out, C_in]  surrogate-branch 1x1 conv weights
    # bg/bl : SMEM [C_out]        surrogate-branch biases
    # ws/bs : SMEM [C_out, C_in], [C_out]  BN+fusion-folded x->sigmoid weights
    # x_ref : VMEM [C_in, TR, LANE]
    # sig/og/ol : VMEM [C_out, TR, LANE]
    c_in = x_ref.shape[0]
    c_out = og_ref.shape[0]

    # Hoist the per-channel input tiles once (f32 accumulation precision).
    xs = [x_ref[ci].astype(jnp.float32) for ci in range(c_in)]

    for co in range(c_out):                       # static, tiny channel counts
        acc_g = bg_ref[co] + wg_ref[co, 0] * xs[0]
        acc_l = bl_ref[co] + wl_ref[co, 0] * xs[0]
        acc_s = bs_ref[co] + ws_ref[co, 0] * xs[0]
        for ci in range(1, c_in):
            acc_g = acc_g + wg_ref[co, ci] * xs[ci]
            acc_l = acc_l + wl_ref[co, ci] * xs[ci]
            acc_s = acc_s + ws_ref[co, ci] * xs[ci]
        og_ref[co] = acc_g.astype(og_ref.dtype)
        ol_ref[co] = acc_l.astype(ol_ref.dtype)
        acc_s = jnp.maximum(acc_s, 0.0)                          # ReLU
        # sigmoid(x) = 1/(1+exp(-x)): exp on EUP, approx reciprocal off VALU.
        sig_ref[co] = pl.reciprocal(1.0 + jnp.exp(-acc_s),
                                    approx=True).astype(sig_ref.dtype)


# ----------------------------------------------------------------------------
# Tiling / VMEM budgeting
# ----------------------------------------------------------------------------
def _vmem_budget():
    """(vmem_limit_bytes, tile_budget_bytes) derived from the chip generation."""
    try:
        phys = pltpu.get_tpu_info().vmem_capacity_bytes
    except Exception:
        phys = 64 * 1024 * 1024                 # conservative (v7x-sized) default
    limit = min(phys // 2, 64 * 1024 * 1024)    # v5e/v6e: 64 MiB, v7x: 32 MiB
    return limit, (limit * 3) // 4              # headroom for compiler scratch


def _choose_tiles(hw, c_in, c_out, n, in_bytes, out_bytes, tile_budget_bytes):
    """Pick (rows, lane, rows_per_tile) for a copy-free (R, LANE) view of H*W.

    `hw` is a multiple of 128 (wrapper pads otherwise), so the lane dim is
    always 128-dense.  Rows-per-tile is sized against an explicit VMEM budget
    that counts the double-buffered pipeline blocks AND the in-kernel f32
    temporaries (hoisted x channels + a few accumulators).
    """
    lanes = [c for c in (512, 256, 128) if hw % c == 0]
    lane = next((c for c in lanes if (hw // c) % 8 == 0), None)   # sublane dense
    if lane is None:
        lane = next((c for c in lanes if (hw // c) >= 8), lanes[-1])
    rows = hw // lane
    # TODO(synk): when H*W < 1024 (rows < 8) the per-channel tiles are
    # inherently sublane-sparse; folding batch/channel into rows would need a
    # transpose costing more HBM traffic than it saves at these tiny sizes.

    bytes_per_row = (2 * c_in * in_bytes            # x block, double buffered
                     + 2 * 3 * c_out * out_bytes    # 3 output blocks, double buffered
                     + (c_in + 4) * 4               # xs + live f32 accumulators
                     ) * lane
    cap = max(1, tile_budget_bytes // bytes_per_row)

    if rows <= cap:
        tr = rows
    else:
        limit = min(rows, cap)
        tr = 0
        d = 8
        while d <= limit:                    # largest multiple-of-8 divisor of rows
            if rows % d == 0:
                tr = d
            d += 8
        if tr == 0:
            tr = min(rows, max(8, (limit // 8) * 8))   # ragged edge handled by Pallas

    # v7x has 2 TensorCores per chip: make sure the parallel grid has >= 2 steps.
    if n * pl.cdiv(rows, tr) < 2 and rows >= 16:
        tr = ((pl.cdiv(rows, 2) + 7) // 8) * 8
    return rows, lane, tr


# ----------------------------------------------------------------------------
# Wrapper
# ----------------------------------------------------------------------------
def _student_pallas(x, wg, bg, wl, bl, wf_eff, bf_eff):
    """Returns (sigmoid(fused), out_global, out_local) in NCHW, dtype = x.dtype."""
    n, c_in, h, w = x.shape
    c_out = wg.shape[0]
    hw = h * w
    out_dtype = x.dtype

    # Fold the fusion head (conv over concat([og, ol]) with BN already folded)
    # algebraically into direct x -> pre-activation weights.  ReLU/sigmoid are
    # applied after this linear map, so the fold is exact.
    w_sig = wf_eff[:, :c_out] @ wg + wf_eff[:, c_out:] @ wl          # (c_out, c_in)
    b_sig = wf_eff[:, :c_out] @ bg + wf_eff[:, c_out:] @ bl + bf_eff  # (c_out,)

    vmem_limit, tile_budget = _vmem_budget()

    # Lane-dense spatial layout: pad H*W up to a 128 multiple if needed.
    # TODO(synk): the pad costs one extra copy of x; unmasked stores / dense
    # output DMA on the write-dominated path more than pay for it.
    hw_pad = ((hw + 127) // 128) * 128
    x_flat = x.reshape(n, c_in, hw)
    if hw_pad != hw:
        x_flat = jnp.pad(x_flat, ((0, 0), (0, 0), (0, hw_pad - hw)))

    in_bytes = x.dtype.itemsize
    out_bytes = jnp.dtype(out_dtype).itemsize
    rows, lane, tr = _choose_tiles(hw_pad, c_in, c_out, n,
                                   in_bytes, out_bytes, tile_budget)
    x4 = x_flat.reshape(n, c_in, rows, lane)       # copy-free view, no transpose

    grid = (n, pl.cdiv(rows, tr))
    smem_spec = pl.BlockSpec(memory_space=pltpu.MemorySpace.SMEM)
    x_spec = pl.BlockSpec((None, c_in, tr, lane), lambda b, r: (b, 0, r, 0))
    o_spec = pl.BlockSpec((None, c_out, tr, lane), lambda b, r: (b, 0, r, 0))
    o_shape = jax.ShapeDtypeStruct((n, c_out, rows, lane), out_dtype)

    cost = pl.CostEstimate(
        flops=int(n * hw_pad * c_out * (6 * c_in + 8)),
        transcendentals=int(n * hw_pad * c_out),
        bytes_accessed=int(n * hw_pad * (c_in * in_bytes + 3 * c_out * out_bytes)),
    )

    sig, og, ol = pl.pallas_call(
        _student_fused_kernel,
        out_shape=(o_shape, o_shape, o_shape),
        grid=grid,
        in_specs=[smem_spec, smem_spec, smem_spec, smem_spec, smem_spec,
                  smem_spec, x_spec],
        out_specs=(o_spec, o_spec, o_spec),
        compiler_params=pltpu.CompilerParams(
            dimension_semantics=("parallel", "parallel"),
            vmem_limit_bytes=vmem_limit),
        cost_estimate=cost,
    )(wg, bg, wl, bl, w_sig, b_sig, x4)

    def unpack(a):
        a = a.reshape(n, c_out, hw_pad)
        if hw_pad != hw:
            a = a[:, :, :hw]
        return a.reshape(n, c_out, h, w)

    return unpack(sig), unpack(og), unpack(ol)


# ----------------------------------------------------------------------------
# StudentNet forward
# ----------------------------------------------------------------------------
def init_params(key, in_channels=1, num_classes=1):
    k = jax.random.split(key, 10)
    return {
        # TODO(synk): TransUNetV2 / AttU_Net definitions were not provided;
        # deterministic 1x1-conv surrogates stand in for the two branches.
        "global_w": jax.random.normal(k[0], (num_classes, in_channels), jnp.float32) * 0.1,
        "global_b": jax.random.normal(k[1], (num_classes,), jnp.float32) * 0.1,
        "local_w": jax.random.normal(k[2], (num_classes, in_channels), jnp.float32) * 0.1,
        "local_b": jax.random.normal(k[3], (num_classes,), jnp.float32) * 0.1,
        # FeatureFusion: Conv2d(2*num_classes, num_classes, k=1) + BatchNorm2d(eval)
        "fuse_w": jax.random.normal(k[4], (num_classes, 2 * num_classes), jnp.float32) * 0.1,
        "fuse_b": jax.random.normal(k[5], (num_classes,), jnp.float32) * 0.1,
        "bn_gamma": 1.0 + 0.1 * jax.random.normal(k[6], (num_classes,), jnp.float32),
        "bn_beta": 0.1 * jax.random.normal(k[7], (num_classes,), jnp.float32),
        "bn_mean": 0.1 * jax.random.normal(k[8], (num_classes,), jnp.float32),
        "bn_var": 1.0 + 0.1 * jax.random.uniform(k[9], (num_classes,), jnp.float32),
        "bn_eps": 1e-5,
    }


@jax.jit
def student_net_forward(params, x):
    # Fold BatchNorm (eval) into the fusion 1x1 conv: y = scale*(Wx + b - mean) + beta
    scale = params["bn_gamma"] / jnp.sqrt(params["bn_var"] + params["bn_eps"])
    w_eff = scale[:, None] * params["fuse_w"]
    b_eff = scale * (params["fuse_b"] - params["bn_mean"]) + params["bn_beta"]

    fused_sig, out_global, out_local = _student_pallas(
        x, params["global_w"], params["global_b"],
        params["local_w"], params["local_b"], w_eff, b_eff)
    return fused_sig, out_global, out_local


# ----------------------------------------------------------------------------
# Pure-JAX reference (verification only)
# ----------------------------------------------------------------------------
def _conv1x1_nchw(x, w, b):
    return jnp.einsum("oc,nchw->nohw", w, x) + b[None, :, None, None]


def _reference_forward(params, x):
    og = _conv1x1_nchw(x, params["global_w"], params["global_b"])
    ol = _conv1x1_nchw(x, params["local_w"], params["local_b"])
    cat = jnp.concatenate([og, ol], axis=1)
    y = _conv1x1_nchw(cat, params["fuse_w"], params["fuse_b"])
    scale = params["bn_gamma"] / jnp.sqrt(params["bn_var"] + params["bn_eps"])
    y = scale[None, :, None, None] * (y - params["bn_mean"][None, :, None, None]) \
        + params["bn_beta"][None, :, None, None]
    y = jnp.maximum(y, 0.0)
    return jax.nn.sigmoid(y), og, ol


if __name__ == "__main__":
    key = jax.random.PRNGKey(0)
    kp, kx, kp2, kx2, kx3 = jax.random.split(key, 5)

    # Case 1: StudentNet defaults (in_channels=1, num_classes=1), f32.
    params = init_params(kp, in_channels=1, num_classes=1)
    x = jax.random.normal(kx, (2, 1, 16, 16), jnp.float32)
    out = student_net_forward(params, x)
    jax.block_until_ready(out)
    ref = _reference_forward(params, x)
    assert out[0].shape == (2, 1, 16, 16)
    # sigmoid path uses approx reciprocal -> slightly looser tolerance
    assert jnp.allclose(out[0], ref[0], atol=2e-3, rtol=2e-3)
    assert jnp.allclose(out[1], ref[1], atol=1e-5, rtol=1e-4)
    assert jnp.allclose(out[2], ref[2], atol=1e-5, rtol=1e-4)

    # Case 2: wider channel counts to exercise the channel loops, f32.
    params2 = init_params(kp2, in_channels=3, num_classes=2)
    x2 = jax.random.normal(kx2, (2, 3, 16, 16), jnp.float32)
    out2 = student_net_forward(params2, x2)
    jax.block_until_ready(out2)
    ref2 = _reference_forward(params2, x2)
    assert out2[0].shape == (2, 2, 16, 16)
    assert jnp.allclose(out2[0], ref2[0], atol=2e-3, rtol=2e-3)
    assert jnp.allclose(out2[1], ref2[1], atol=1e-5, rtol=1e-4)
    assert jnp.allclose(out2[2], ref2[2], atol=1e-5, rtol=1e-4)

    # Case 3: non-128-multiple H*W (padding path) + bf16 in/out (halved writes).
    params3 = init_params(kp2, in_channels=2, num_classes=1)
    x3 = jax.random.normal(kx3, (1, 2, 10, 10), jnp.float32).astype(jnp.bfloat16)
    out3 = student_net_forward(params3, x3)
    jax.block_until_ready(out3)
    ref3 = _reference_forward(params3, x3)
    assert out3[0].shape == (1, 1, 10, 10) and out3[0].dtype == jnp.bfloat16
    assert jnp.allclose(out3[0].astype(jnp.float32), ref3[0], atol=3e-2, rtol=3e-2)
    assert jnp.allclose(out3[1].astype(jnp.float32), ref3[1], atol=3e-2, rtol=3e-2)
    assert jnp.allclose(out3[2].astype(jnp.float32), ref3[2], atol=3e-2, rtol=3e-2)

    print("KERNEL_OK")
</pallas_src>

<mosaic_0001>
module attributes {stable_mosaic.version = 11 : i64} {
  func.func @_student_fused_kernel(%arg0: i32, %arg1: i32, %arg2: memref<1x1xf32, #tpu.memory_space<smem>>, %arg3: memref<1xf32, #tpu.memory_space<smem>>, %arg4: memref<1x1xf32, #tpu.memory_space<smem>>, %arg5: memref<1xf32, #tpu.memory_space<smem>>, %arg6: memref<1x1xf32, #tpu.memory_space<smem>>, %arg7: memref<1xf32, #tpu.memory_space<smem>>, %arg8: memref<1x1x2x128xf32, #tpu.memory_space<vmem>>, %arg9: memref<1x1x2x128xf32, #tpu.memory_space<vmem>>, %arg10: memref<1x1x2x128xf32, #tpu.memory_space<vmem>>, %arg11: memref<1x1x2x128xf32, #tpu.memory_space<vmem>>) attributes {dimension_semantics = [#tpu.dimension_semantics<parallel>, #tpu.dimension_semantics<parallel>], iteration_bounds = array<i64: 2, 1>, scalar_prefetch = 0 : i64, scratch_operands = 0 : i64, tpu.core_type = #tpu.core_type<tc>, window_params = [{transform_indices = @transform_0, window_bounds = array<i64: 1, 1>}, {transform_indices = @transform_1, window_bounds = array<i64: 1>}, {transform_indices = @transform_2, window_bounds = array<i64: 1, 1>}, {transform_indices = @transform_3, window_bounds = array<i64: 1>}, {transform_indices = @transform_4, window_bounds = array<i64: 1, 1>}, {transform_indices = @transform_5, window_bounds = array<i64: 1>}, {transform_indices = @transform_6, window_bounds = array<i64: 1, 1, 2, 128>}, {transform_indices = @transform_7, window_bounds = array<i64: 1, 1, 2, 128>}, {transform_indices = @transform_8, window_bounds = array<i64: 1, 1, 2, 128>}, {transform_indices = @transform_9, window_bounds = array<i64: 1, 1, 2, 128>}]} {
    %c0 = arith.constant 0 : index
    %c0_0 = arith.constant 0 : index
    %c0_1 = arith.constant 0 : index
    %c0_2 = arith.constant 0 : index
    %0 = vector.load %arg8[%c0, %c0_0, %c0_1, %c0_2] : memref<1x1x2x128xf32, #tpu.memory_space<vmem>>, vector<1x1x2x128xf32>
    %1 = vector.shape_cast %0 : vector<1x1x2x128xf32> to vector<2x128xf32>
    %c0_3 = arith.constant 0 : index
    %2 = memref.load %arg3[%c0_3] : memref<1xf32, #tpu.memory_space<smem>>
    %c0_4 = arith.constant 0 : index
    %c0_5 = arith.constant 0 : index
    %3 = memref.load %arg2[%c0_4, %c0_5] : memref<1x1xf32, #tpu.memory_space<smem>>
    %4 = vector.broadcast %3 : f32 to vector<2x128xf32>
    %5 = arith.mulf %4, %1 : vector<2x128xf32>
    %6 = vector.broadcast %2 : f32 to vector<2x128xf32>
    %7 = arith.addf %6, %5 : vector<2x128xf32>
    %c0_6 = arith.constant 0 : index
    %8 = memref.load %arg5[%c0_6] : memref<1xf32, #tpu.memory_space<smem>>
    %c0_7 = arith.constant 0 : index
    %c0_8 = arith.constant 0 : index
    %9 = memref.load %arg4[%c0_7, %c0_8] : memref<1x1xf32, #tpu.memory_space<smem>>
    %10 = vector.broadcast %9 : f32 to vector<2x128xf32>
    %11 = arith.mulf %10, %1 : vector<2x128xf32>
    %12 = vector.broadcast %8 : f32 to vector<2x128xf32>
    %13 = arith.addf %12, %11 : vector<2x128xf32>
    %c0_9 = arith.constant 0 : index
    %14 = memref.load %arg7[%c0_9] : memref<1xf32, #tpu.memory_space<smem>>
    %c0_10 = arith.constant 0 : index
    %c0_11 = arith.constant 0 : index
    %15 = memref.load %arg6[%c0_10, %c0_11] : memref<1x1xf32, #tpu.memory_space<smem>>
    %16 = vector.broadcast %15 : f32 to vector<2x128xf32>
    %17 = arith.mulf %16, %1 : vector<2x128xf32>
    %18 = vector.broadcast %14 : f32 to vector<2x128xf32>
    %19 = arith.addf %18, %17 : vector<2x128xf32>
    %c0_12 = arith.constant 0 : index
    %c0_13 = arith.constant 0 : index
    %c0_14 = arith.constant 0 : index
    %c0_15 = arith.constant 0 : index
    %20 = vector.load %arg10[%c0_12, %c0_13, %c0_14, %c0_15] : memref<1x1x2x128xf32, #tpu.memory_space<vmem>>, vector<1x1x2x128xf32>
    %21 = vector.shape_cast %20 : vector<1x1x2x128xf32> to vector<2x128xf32>
    %22 = vector.shape_cast %7 : vector<2x128xf32> to vector<1x1x2x128xf32>
    tpu.vector_store %arg10[%c0_12, %c0_13, %c0_14, %c0_15], %22 {strides = array<i32>} : memref<1x1x2x128xf32, #tpu.memory_space<vmem>>, vector<1x1x2x128xf32>,
    %c0_16 = arith.constant 0 : index
    %c0_17 = arith.constant 0 : index
    %c0_18 = arith.constant 0 : index
    %c0_19 = arith.constant 0 : index
    %23 = vector.load %arg11[%c0_16, %c0_17, %c0_18, %c0_19] : memref<1x1x2x128xf32, #tpu.memory_space<vmem>>, vector<1x1x2x128xf32>
    %24 = vector.shape_cast %23 : vector<1x1x2x128xf32> to vector<2x128xf32>
    %25 = vector.shape_cast %13 : vector<2x128xf32> to vector<1x1x2x128xf32>
    tpu.vector_store %arg11[%c0_16, %c0_17, %c0_18, %c0_19], %25 {strides = array<i32>} : memref<1x1x2x128xf32, #tpu.memory_space<vmem>>, vector<1x1x2x128xf32>,
    %cst = arith.constant 0.000000e+00 : f32
    %26 = vector.broadcast %cst : f32 to vector<2x128xf32>
    %27 = arith.maximumf %19, %26 : vector<2x128xf32>
    %cst_20 = arith.constant 0.000000e+00 : f32
    %28 = vector.broadcast %cst_20 : f32 to vector<2x128xf32>
    %29 = arith.subf %28, %27 : vector<2x128xf32>
    %30 = math.exp %29 : vector<2x128xf32>
    %cst_21 = arith.constant 1.000000e+00 : f32
    %31 = vector.broadcast %cst_21 : f32 to vector<2x128xf32>
    %32 = arith.addf %31, %30 : vector<2x128xf32>
    %33 = tpu.reciprocal %32 {approx = true} : vector<2x128xf32> -> vector<2x128xf32>
    %c0_22 = arith.constant 0 : index
    %c0_23 = arith.constant 0 : index
    %c0_24 = arith.constant 0 : index
    %c0_25 = arith.constant 0 : index
    %34 = vector.load %arg9[%c0_22, %c0_23, %c0_24, %c0_25] : memref<1x1x2x128xf32, #tpu.memory_space<vmem>>, vector<1x1x2x128xf32>
    %35 = vector.shape_cast %34 : vector<1x1x2x128xf32> to vector<2x128xf32>
    %36 = vector.shape_cast %33 : vector<2x128xf32> to vector<1x1x2x128xf32>
    tpu.vector_store %arg9[%c0_22, %c0_23, %c0_24, %c0_25], %36 {strides = array<i32>} : memref<1x1x2x128xf32, #tpu.memory_space<vmem>>, vector<1x1x2x128xf32>,
    return
  }
  func.func @transform_0(%arg0: i32, %arg1: i32) -> (i32, i32) {
    %c0_i32 = arith.constant 0 : i32
    %c0_i32_0 = arith.constant 0 : i32
    %c0_i32_1 = arith.constant 0 : i32
    return %c0_i32, %c0_i32_0 : i32, i32
  }
  func.func @transform_1(%arg0: i32, %arg1: i32) -> i32 {
    %c0_i32 = arith.constant 0 : i32
    %c0_i32_0 = arith.constant 0 : i32
    return %c0_i32 : i32
  }
  func.func @transform_2(%arg0: i32, %arg1: i32) -> (i32, i32) {
    %c0_i32 = arith.constant 0 : i32
    %c0_i32_0 = arith.constant 0 : i32
    %c0_i32_1 = arith.constant 0 : i32
    return %c0_i32, %c0_i32_0 : i32, i32
  }
  func.func @transform_3(%arg0: i32, %arg1: i32) -> i32 {
    %c0_i32 = arith.constant 0 : i32
    %c0_i32_0 = arith.constant 0 : i32
    return %c0_i32 : i32
  }
  func.func @transform_4(%arg0: i32, %arg1: i32) -> (i32, i32) {
    %c0_i32 = arith.constant 0 : i32
    %c0_i32_0 = arith.constant 0 : i32
    %c0_i32_1 = arith.constant 0 : i32
    return %c0_i32, %c0_i32_0 : i32, i32
  }
  func.func @transform_5(%arg0: i32, %arg1: i32) -> i32 {
    %c0_i32 = arith.constant 0 : i32
    %c0_i32_0 = arith.constant 0 : i32
    return %c0_i32 : i32
  }
  func.func @transform_6(%arg0: i32, %arg1: i32) -> (i32, i32, i32, i32) {
    %c0_i32 = arith.constant 0 : i32
    %c0_i32_0 = arith.constant 0 : i32
    %c0_i32_1 = arith.constant 0 : i32
    return %arg0, %c0_i32, %arg1, %c0_i32_0 : i32, i32, i32, i32
  }
  func.func @transform_7(%arg0: i32, %arg1: i32) -> (i32, i32, i32, i32) {
    %c0_i32 = arith.constant 0 : i32
    %c0_i32_0 = arith.constant 0 : i32
    %c0_i32_1 = arith.constant 0 : i32
    return %arg0, %c0_i32, %arg1, %c0_i32_0 : i32, i32, i32, i32
  }
  func.func @transform_8(%arg0: i32, %arg1: i32) -> (i32, i32, i32, i32) {
    %c0_i32 = arith.constant 0 : i32
    %c0_i32_0 = arith.constant 0 : i32
    %c0_i32_1 = arith.constant 0 : i32
    return %arg0, %c0_i32, %arg1, %c0_i32_0 : i32, i32, i32, i32
  }
  func.func @transform_9(%arg0: i32, %arg1: i32) -> (i32, i32, i32, i32) {
    %c0_i32 = arith.constant 0 : i32
    %c0_i32_0 = arith.constant 0 : i32
    %c0_i32_1 = arith.constant 0 : i32
    return %arg0, %c0_i32, %arg1, %c0_i32_0 : i32, i32, i32, i32
  }
}

</mosaic_0001>

<llo_original>
// kernel: student_net_forward.1
$region0: #{student_net_forward.1}
  #allocation0 [shape = 'u32[]', space=smem, size = 0x4, offset = 0x4, fixed_abs, tag = 'smem constant byte address 0x4 - core index']
  #allocation1 [shape = 'u32[72,128]{1,0:T(1,128)}', space=vmem, size = 0x9000, scoped, tag = 'internal scratch']
  #allocation2 [shape = 'f32[1,1]{1,0:T(1,128)S(6)}', space=smem, size = 0x200, scoped, tag = 'scoped memory for student_net_forward.1']
  #allocation3 [shape = 'f32[1]{0:T(128)S(6)}', space=smem, size = 0x200, scoped, tag = 'scoped memory for student_net_forward.1']
  #allocation4 [shape = 'f32[1,1]{1,0:T(1,128)S(6)}', space=smem, size = 0x200, scoped, tag = 'scoped memory for student_net_forward.1']
  #allocation5 [shape = 'f32[1]{0:T(128)S(6)}', space=smem, size = 0x200, scoped, tag = 'scoped memory for student_net_forward.1']
  #allocation6 [shape = 'f32[1,1]{1,0:T(1,128)S(6)}', space=smem, size = 0x200, scoped, tag = 'scoped memory for student_net_forward.1']
  #allocation7 [shape = 'f32[1]{0:T(128)S(6)}', space=smem, size = 0x200, scoped, tag = 'scoped memory for student_net_forward.1']
  %s0 = inlined_call_operand.<no memory space> [shape: f32[1,1], index: 0, kind: input, shape index: {}]
  %s1 = inlined_call_operand.<no memory space> [shape: f32[1], index: 1, kind: input, shape index: {}]
  %s2 = inlined_call_operand.<no memory space> [shape: f32[1,1], index: 2, kind: input, shape index: {}]
  %s3 = inlined_call_operand.<no memory space> [shape: f32[1], index: 3, kind: input, shape index: {}]
  %s4 = inlined_call_operand.<no memory space> [shape: f32[1,1], index: 4, kind: input, shape index: {}]
  %s5 = inlined_call_operand.<no memory space> [shape: f32[1], index: 5, kind: input, shape index: {}]
  %s6 = inlined_call_operand.vmem [shape: f32[2,1,2,128], index: 6, kind: input, shape index: {}]
  %s7 = inlined_call_operand.vmem [shape: f32[2,1,2,128], index: 7, kind: output, shape index: {0}]
  %s8 = inlined_call_operand.vmem [shape: f32[2,1,2,128], index: 8, kind: output, shape index: {1}]
  %s9 = inlined_call_operand.vmem [shape: f32[2,1,2,128], index: 9, kind: output, shape index: {2}]
  %10 = xla_tuple %s7, %s8, %s9
  %s11 = sld [smem:[#allocation0]]
  $region77: #{student_net_forward.1} parent=0
    _
  %s13 = ssub.s32 1, %s11
  %s14 = scalar_select 0, %s13, %s11
  %15 = sst [smem:[#allocation2]] %s0
  %16 = sst [smem:[#allocation3]] %s1
  %17 = sst [smem:[#allocation4]] %s2
  %18 = sst [smem:[#allocation5]] %s3
  %19 = sst [smem:[#allocation6]] %s4
  %20 = sst [smem:[#allocation7]] %s5
  loop: start=0, step=1, limit=4
  $region2: #{student_net_forward.1} parent=0 // loop_pre_header
    _
  $region3: #{student_net_forward.1} parent=0 // loop_header
    %s22 = sphi 0, %s26
    %p23 = scmp.ge.s32.totalorder %s22, 4
    %s29 = sphi 0, %s41
    %s30 = sphi 0, %s37
    %s31 = sphi 0, %s29
    %s32 = sphi 0, %s30
    %s33 = sphi 0, %s31
    %s34 = sphi 0, %s32
    %s42 = sphi 0, %s42
    %s44 = sphi 0, %s42
    %s45 = sphi 0, %s44
    %s59 = sphi 0, %s45
    %s63 = sphi 0, %s63
    %s65 = sphi 0, %s63
    %s66 = sphi 0, %s65
    %s80 = sphi 0, %s66
    %s84 = sphi 0, %s84
    %s86 = sphi 0, %s84
    %s87 = sphi 0, %s86
    %s101 = sphi 0, %s87
    %s105 = sphi 0, %s105
    %s107 = sphi 0, %s105
    %s108 = sphi 0, %s107
    %s122 = sphi 0, %s108
    %s126 = sphi 0, %s126
    %s128 = sphi 0, %s126
    %s129 = sphi 0, %s128
    %s143 = sphi 0, %s129
    %s147 = sphi 0, %s147
    %s149 = sphi 0, %s147
    %s150 = sphi 0, %s149
    %s164 = sphi 0, %s150
    %s172 = sphi 0, %s174
    %s175 = sphi 0, %s172
    %s176 = sphi 0, %s175
    %s192 = sphi 0, %s176
    %s200 = sphi 0, %s202
    %s203 = sphi 0, %s200
    %s204 = sphi 0, %s203
    %s220 = sphi 0, %s204
    %s228 = sphi 0, %s230
    %s231 = sphi 0, %s228
    %s232 = sphi 0, %s231
    %s248 = sphi 0, %s232
    %s256 = sphi 0, %s258
    %s259 = sphi 0, %s256
    %s260 = sphi 0, %s259
    %s276 = sphi 0, %s260
  $region4: #{student_net_forward.1} parent=0 // loop_header_branch
    %25 = sbr.rel (%p23) target = $region8
  $region5: #{student_net_forward.1} parent=0 // loop_body
    %s27 = ssub.s32 %s22, 1
    %s28 = ssub.s32 %s22, 2
    %s35 = sadd.s32 1, %s30
    %p36 = scmp.ge.s32.totalorder %s35, 1
    %s37 = scalar_select %p36, 0, %s35
    %s38 = sadd.s32 1, %s29
    %s39 = scalar_select %p36, %s38, %s29
    %p40 = scmp.ge.s32.totalorder %s39, 2
    %s41 = scalar_select %p40, 0, %s39
    %s43 = sadd.s32 %s42, 1
    %p46 = scmp.eq.s32.totalorder %s22, 1
    %p47 = scmp.ne.s32.totalorder %s42, %s44
    %p48 = scmp.eq.s32.totalorder %s22, 0
    %p49 = por %p47, %p48
    %p50 = scmp.ne.s32.totalorder %s42, %s44
    %p51 = scmp.eq.s32.totalorder %s27, 1
    %p52 = por %p50, %p51
    %p53 = scmp.ne.s32.totalorder %s44, %s45
    %p54 = scmp.eq.s32.totalorder %s27, 0
    %p55 = por %p53, %p54
    %p56 = scmp.ne.s32.totalorder %s44, %s45
    %p57 = scmp.eq.s32.totalorder %s28, 1
    %p58 = por %p56, %p57
    %p60 = scmp.ne.s32.totalorder %s45, %s59
    %p61 = scmp.eq.s32.totalorder %s28, 0
    %p62 = por %p60, %p61
    %s64 = sadd.s32 %s63, 1
    %p67 = scmp.eq.s32.totalorder %s22, 1
    %p68 = scmp.ne.s32.totalorder %s63, %s65
    %p69 = scmp.eq.s32.totalorder %s22, 0
    %p70 = por %p68, %p69
    %p71 = scmp.ne.s32.totalorder %s63, %s65
    %p72 = scmp.eq.s32.totalorder %s27, 1
    %p73 = por %p71, %p72
    %p74 = scmp.ne.s32.totalorder %s65, %s66
    %p75 = scmp.eq.s32.totalorder %s27, 0
    %p76 = por %p74, %p75
    %p77 = scmp.ne.s32.totalorder %s65, %s66
    %p78 = scmp.eq.s32.totalorder %s28, 1
    %p79 = por %p77, %p78
    %p81 = scmp.ne.s32.totalorder %s66, %s80
    %p82 = scmp.eq.s32.totalorder %s28, 0
    %p83 = por %p81, %p82
    %s85 = sadd.s32 %s84, 1
    %p88 = scmp.eq.s32.totalorder %s22, 1
    %p89 = scmp.ne.s32.totalorder %s84, %s86
    %p90 = scmp.eq.s32.totalorder %s22, 0
    %p91 = por %p89, %p90
    %p92 = scmp.ne.s32.totalorder %s84, %s86
    %p93 = scmp.eq.s32.totalorder %s27, 1
    %p94 = por %p92, %p93
    %p95 = scmp.ne.s32.totalorder %s86, %s87
    %p96 = scmp.eq.s32.totalorder %s27, 0
    %p97 = por %p95, %p96
    %p98 = scmp.ne.s32.totalorder %s86, %s87
    %p99 = scmp.eq.s32.totalorder %s28, 1
    %p100 = por %p98, %p99
    %p102 = scmp.ne.s32.totalorder %s87, %s101
    %p103 = scmp.eq.s32.totalorder %s28, 0
    %p104 = por %p102, %p103
    %s106 = sadd.s32 %s105, 1
    %p109 = scmp.eq.s32.totalorder %s22, 1
    %p110 = scmp.ne.s32.totalorder %s105, %s107
    %p111 = scmp.eq.s32.totalorder %s22, 0
    %p112 = por %p110, %p111
    %p113 = scmp.ne.s32.totalorder %s105, %s107
    %p114 = scmp.eq.s32.totalorder %s27, 1
    %p115 = por %p113, %p114
    %p116 = scmp.ne.s32.totalorder %s107, %s108
    %p117 = scmp.eq.s32.totalorder %s27, 0
    %p118 = por %p116, %p117
    %p119 = scmp.ne.s32.totalorder %s107, %s108
    %p120 = scmp.eq.s32.totalorder %s28, 1
    %p121 = por %p119, %p120
    %p123 = scmp.ne.s32.totalorder %s108, %s122
    %p124 = scmp.eq.s32.totalorder %s28, 0
    %p125 = por %p123, %p124
    %s127 = sadd.s32 %s126, 1
    %p130 = scmp.eq.s32.totalorder %s22, 1
    %p131 = scmp.ne.s32.totalorder %s126, %s128
    %p132 = scmp.eq.s32.totalorder %s22, 0
    %p133 = por %p131, %p132
    %p134 = scmp.ne.s32.totalorder %s126, %s128
    %p135 = scmp.eq.s32.totalorder %s27, 1
    %p136 = por %p134, %p135
    %p137 = scmp.ne.s32.totalorder %s128, %s129
    %p138 = scmp.eq.s32.totalorder %s27, 0
    %p139 = por %p137, %p138
    %p140 = scmp.ne.s32.totalorder %s128, %s129
    %p141 = scmp.eq.s32.totalorder %s28, 1
    %p142 = por %p140, %p141
    %p144 = scmp.ne.s32.totalorder %s129, %s143
    %p145 = scmp.eq.s32.totalorder %s28, 0
    %p146 = por %p144, %p145
    %s148 = sadd.s32 %s147, 1
    %p151 = scmp.eq.s32.totalorder %s22, 1
    %p152 = scmp.ne.s32.totalorder %s147, %s149
    %p153 = scmp.eq.s32.totalorder %s22, 0
    %p154 = por %p152, %p153
    %p155 = scmp.ne.s32.totalorder %s147, %s149
    %p156 = scmp.eq.s32.totalorder %s27, 1
    %p157 = por %p155, %p156
    %p158 = scmp.ne.s32.totalorder %s149, %s150
    %p159 = scmp.eq.s32.totalorder %s27, 0
    %p160 = por %p158, %p159
    %p161 = scmp.ne.s32.totalorder %s149, %s150
    %p162 = scmp.eq.s32.totalorder %s28, 1
    %p163 = por %p161, %p162
    %p165 = scmp.ne.s32.totalorder %s150, %s164
    %p166 = scmp.eq.s32.totalorder %s28, 0
    %p167 = por %p165, %p166
    %s168 = ssub.s32 %s29, %s41
    %s169 = ssub.s32 %s30, %s37
    %s170 = sor.u32 %s168, %s169
    %p171 = scmp.eq.s32.totalorder %s170, 0
    %s173 = sadd.s32 %s172, 1
    %s174 = scalar_select %p171, %s172, %s173
    %p177 = pneg %p171
    %p178 = scmp.eq.s32.totalorder %s22, 1
    %p179 = por %p177, %p178
    %p180 = scmp.ne.s32.totalorder %s172, %s175
    %p181 = scmp.eq.s32.totalorder %s22, 0
    %p182 = por %p180, %p181
    %p183 = scmp.ne.s32.totalorder %s172, %s175
    %p184 = scmp.eq.s32.totalorder %s27, 1
    %p185 = por %p183, %p184
    %p186 = scmp.ne.s32.totalorder %s175, %s176
    %p187 = scmp.eq.s32.totalorder %s27, 0
    %p188 = por %p186, %p187
    %p189 = scmp.ne.s32.totalorder %s175, %s176
    %p190 = scmp.eq.s32.totalorder %s28, 1
    %p191 = por %p189, %p190
    %p193 = scmp.ne.s32.totalorder %s176, %s192
    %p194 = scmp.eq.s32.totalorder %s28, 0
    %p195 = por %p193, %p194
    %s196 = ssub.s32 %s29, %s41
    %s197 = ssub.s32 %s30, %s37
    %s198 = sor.u32 %s196, %s197
    %p199 = scmp.eq.s32.totalorder %s198, 0
    %s201 = sadd.s32 %s200, 1
    %s202 = scalar_select %p199, %s200, %s201
    %p205 = pneg %p199
    %p206 = scmp.eq.s32.totalorder %s22, 1
    %p207 = por %p205, %p206
    %p208 = scmp.ne.s32.totalorder %s200, %s203
    %p209 = scmp.eq.s32.totalorder %s22, 0
    %p210 = por %p208, %p209
    %p211 = scmp.ne.s32.totalorder %s200, %s203
    %p212 = scmp.eq.s32.totalorder %s27, 1
    %p213 = por %p211, %p212
    %p214 = scmp.ne.s32.totalorder %s203, %s204
    %p215 = scmp.eq.s32.totalorder %s27, 0
    %p216 = por %p214, %p215
    %p217 = scmp.ne.s32.totalorder %s203, %s204
    %p218 = scmp.eq.s32.totalorder %s28, 1
    %p219 = por %p217, %p218
    %p221 = scmp.ne.s32.totalorder %s204, %s220
    %p222 = scmp.eq.s32.totalorder %s28, 0
    %p223 = por %p221, %p222
    %s224 = ssub.s32 %s29, %s41
    %s225 = ssub.s32 %s30, %s37
    %s226 = sor.u32 %s224, %s225
    %p227 = scmp.eq.s32.totalorder %s226, 0
    %s229 = sadd.s32 %s228, 1
    %s230 = scalar_select %p227, %s228, %s229
    %p233 = pneg %p227
    %p234 = scmp.eq.s32.totalorder %s22, 1
    %p235 = por %p233, %p234
    %p236 = scmp.ne.s32.totalorder %s228, %s231
    %p237 = scmp.eq.s32.totalorder %s22, 0
    %p238 = por %p236, %p237
    %p239 = scmp.ne.s32.totalorder %s228, %s231
    %p240 = scmp.eq.s32.totalorder %s27, 1
    %p241 = por %p239, %p240
    %p242 = scmp.ne.s32.totalorder %s231, %s232
    %p243 = scmp.eq.s32.totalorder %s27, 0
    %p244 = por %p242, %p243
    %p245 = scmp.ne.s32.totalorder %s231, %s232
    %p246 = scmp.eq.s32.totalorder %s28, 1
    %p247 = por %p245, %p246
    %p249 = scmp.ne.s32.totalorder %s232, %s248
    %p250 = scmp.eq.s32.totalorder %s28, 0
    %p251 = por %p249, %p250
    %s252 = ssub.s32 %s29, %s41
    %s253 = ssub.s32 %s30, %s37
    %s254 = sor.u32 %s252, %s253
    %p255 = scmp.eq.s32.totalorder %s254, 0
    %s257 = sadd.s32 %s256, 1
    %s258 = scalar_select %p255, %s256, %s257
    %p261 = pneg %p255
    %p262 = scmp.eq.s32.totalorder %s22, 1
    %p263 = por %p261, %p262
    %p264 = scmp.ne.s32.totalorder %s256, %s259
    %p265 = scmp.eq.s32.totalorder %s22, 0
    %p266 = por %p264, %p265
    %p267 = scmp.ne.s32.totalorder %s256, %s259
    %p268 = scmp.eq.s32.totalorder %s27, 1
    %p269 = por %p267, %p268
    %p270 = scmp.ne.s32.totalorder %s259, %s260
    %p271 = scmp.eq.s32.totalorder %s27, 0
    %p272 = por %p270, %p271
    %p273 = scmp.ne.s32.totalorder %s259, %s260
    %p274 = scmp.eq.s32.totalorder %s28, 1
    %p275 = por %p273, %p274
    %p277 = scmp.ne.s32.totalorder %s260, %s276
    %p278 = scmp.eq.s32.totalorder %s28, 0
    %p279 = por %p277, %p278
    %p280 = scmp.le.s32.totalorder 1, %s22
    %p281 = scmp.lt.s32.totalorder %s22, 3
    %p282 = pnand %p280, %p281
    %p283 = pneg %p282
    // Predicated region
    $region9: #{student_net_forward.1} parent=5 // pred_check
      _
    $region10: #{student_net_forward.1} parent=5 // pred_check_branch
      %285 = sbr.rel (%p282) target = $region12
    $region11: #{student_net_forward.1} parent=5 // pred_region
      %s286 = ssub.s32 %s22, 1
      // Predicated region
      $region13: #{student_net_forward.1} parent=11 // pred_check
        %p287 = pneg %p55
      $region14: #{student_net_forward.1} parent=11 // pred_check_branch
        %289 = sbr.rel (%p287) target = $region16
      $region15: #{student_net_forward.1} parent=11 // pred_region
        _
      $region16: #{student_net_forward.1} parent=11 // pred_fallthru
        _
      // Predicated region
      $region17: #{student_net_forward.1} parent=11 // pred_check
        %p290 = pneg %p76
      $region18: #{student_net_forward.1} parent=11 // pred_check_branch
        %292 = sbr.rel (%p290) target = $region20
      $region19: #{student_net_forward.1} parent=11 // pred_region
        _
      $region20: #{student_net_forward.1} parent=11 // pred_fallthru
        _
      // Predicated region
      $region21: #{student_net_forward.1} parent=11 // pred_check
        %p293 = pneg %p97
      $region22: #{student_net_forward.1} parent=11 // pred_check_branch
        %295 = sbr.rel (%p293) target = $region24
      $region23: #{student_net_forward.1} parent=11 // pred_region
        _
      $region24: #{student_net_forward.1} parent=11 // pred_fallthru
        _
      // Predicated region
      $region25: #{student_net_forward.1} parent=11 // pred_check
        %p296 = pneg %p118
      $region26: #{student_net_forward.1} parent=11 // pred_check_branch
        %298 = sbr.rel (%p296) target = $region28
      $region27: #{student_net_forward.1} parent=11 // pred_region
        _
      $region28: #{student_net_forward.1} parent=11 // pred_fallthru
        _
      // Predicated region
      $region29: #{student_net_forward.1} parent=11 // pred_check
        %p299 = pneg %p139
      $region30: #{student_net_forward.1} parent=11 // pred_check_branch
        %301 = sbr.rel (%p299) target = $region32
      $region31: #{student_net_forward.1} parent=11 // pred_region
        _
      $region32: #{student_net_forward.1} parent=11 // pred_fallthru
        _
      // Predicated region
      $region33: #{student_net_forward.1} parent=11 // pred_check
        %p302 = pneg %p160
      $region34: #{student_net_forward.1} parent=11 // pred_check_branch
        %304 = sbr.rel (%p302) target = $region36
      $region35: #{student_net_forward.1} parent=11 // pred_region
        _
      $region36: #{student_net_forward.1} parent=11 // pred_fallthru
        _
    $region12: #{student_net_forward.1} parent=5 // pred_fallthru
      _
    %p305 = scmp.lt.s32.totalorder %s22, 2
    // Predicated region
    $region37: #{student_net_forward.1} parent=5 // pred_check
      %p306 = pneg %p305
    $region38: #{student_net_forward.1} parent=5 // pred_check_branch
      %308 = sbr.rel (%p306) target = $region40
    $region39: #{student_net_forward.1} parent=5 // pred_region
      // Predicated region
      $region41: #{student_net_forward.1} parent=39 // pred_check
        %p309 = pneg %p182
      $region42: #{student_net_forward.1} parent=39 // pred_check_branch
        %311 = sbr.rel (%p309) target = $region44
      $region43: #{student_net_forward.1} parent=39 // pred_region
        %p312 = scmp.lt.s32.totalorder %s29, 1
        %s313 = scalar_select %p312, %s29, 1
        %p314 = scmp.lt.s32.totalorder %s30, 0
        %s315 = scalar_select %p314, %s30, 0
        %s316 = sadd.s32 %s315, %s313
        %s317 = smul.addr %s316, 2
        %s318 = scalar_lea.vmem %s6, %s317
      $region44: #{student_net_forward.1} parent=39 // pred_fallthru
        _
    $region40: #{student_net_forward.1} parent=5 // pred_fallthru
      _
    %p319 = scmp.le.s32.totalorder 1, %s22
    %p320 = scmp.lt.s32.totalorder %s22, 3
    %p321 = pnand %p319, %p320
    %p322 = pneg %p321
    // Predicated region
    $region45: #{student_net_forward.1} parent=5 // pred_check
      _
    $region46: #{student_net_forward.1} parent=5 // pred_check_branch
      %324 = sbr.rel (%p321) target = $region48
    $region47: #{student_net_forward.1} parent=5 // pred_region
      %s325 = ssub.s32 %s22, 1
      %p326 = pneg %p55
      %p327 = pneg %p52
      %p328 = pneg %p76
      %p329 = pneg %p73
      %p330 = pneg %p97
      %p331 = pneg %p94
      %p332 = pneg %p118
      %p333 = pneg %p115
      %p334 = pneg %p139
      %p335 = pneg %p136
      %p336 = pneg %p160
      %p337 = pneg %p157
      %p338 = scmp.lt.s32.totalorder %s31, 1
      %s339 = scalar_select %p338, %s31, 1
      %p340 = scmp.lt.s32.totalorder %s32, 0
      %s341 = scalar_select %p340, %s32, 0
      %s342 = sadd.s32 %s341, %s339
      %s343 = smul.addr %s342, 2
      %s344 = scalar_lea.vmem %s6, %s343
      %p345 = pneg %p188
      %p346 = pneg %p185
      %p347 = pneg %p216
      %p348 = pneg %p213
      %p349 = scmp.lt.s32.totalorder %s31, 1
      %s350 = scalar_select %p349, %s31, 1
      %p351 = scmp.lt.s32.totalorder %s32, 0
      %s352 = scalar_select %p351, %s32, 0
      %s353 = sadd.s32 %s352, %s350
      %s354 = smul.addr %s353, 2
      %s355 = scalar_lea.vmem %s7, %s354
      %p356 = pneg %p244
      %p357 = pneg %p241
      %p358 = scmp.lt.s32.totalorder %s31, 1
      %s359 = scalar_select %p358, %s31, 1
      %p360 = scmp.lt.s32.totalorder %s32, 0
      %s361 = scalar_select %p360, %s32, 0
      %s362 = sadd.s32 %s361, %s359
      %s363 = smul.addr %s362, 2
      %s364 = scalar_lea.vmem %s8, %s363
      %p365 = pneg %p272
      %p366 = pneg %p269
      %p367 = scmp.lt.s32.totalorder %s31, 1
      %s368 = scalar_select %p367, %s31, 1
      %p369 = scmp.lt.s32.totalorder %s32, 0
      %s370 = scalar_select %p369, %s32, 0
      %s371 = sadd.s32 %s370, %s368
      %s372 = smul.addr %s371, 2
      %s373 = scalar_lea.vmem %s9, %s372
      %p374 = scmp.lt.s32.totalorder %s31, 1
      %s375 = scalar_select %p374, %s31, 1
      %p376 = scmp.lt.s32.totalorder %s32, 0
      %s377 = scalar_select %p376, %s32, 0
      %s378 = sadd.s32 %s377, %s375
      %s379 = smul.addr %s378, 2
      %s380 = scalar_lea.vmem %s6, %s379
      %p381 = scmp.lt.s32.totalorder %s31, 1
      %s382 = scalar_select %p381, %s31, 1
      %p383 = scmp.lt.s32.totalorder %s32, 0
      %s384 = scalar_select %p383, %s32, 0
      %s385 = sadd.s32 %s384, %s382
      %s386 = smul.addr %s385, 2
      %s387 = scalar_lea.vmem %s7, %s386
      %p388 = scmp.lt.s32.totalorder %s31, 1
      %s389 = scalar_select %p388, %s31, 1
      %p390 = scmp.lt.s32.totalorder %s32, 0
      %s391 = scalar_select %p390, %s32, 0
      %s392 = sadd.s32 %s391, %s389
      %s393 = smul.addr %s392, 2
      %s394 = scalar_lea.vmem %s8, %s393
      %p395 = scmp.lt.s32.totalorder %s31, 1
      %s396 = scalar_select %p395, %s31, 1
      %p397 = scmp.lt.s32.totalorder %s32, 0
      %s398 = scalar_select %p397, %s32, 0
      %s399 = sadd.s32 %s398, %s396
      %s400 = smul.addr %s399, 2
      %s401 = scalar_lea.vmem %s9, %s400
      %v402 = vld [vmem:[%s380] sm:$0x3]
      %s403 = sld [smem:[#allocation3]]
      %s404 = sld [smem:[#allocation2]]
      %v405 = vstv %s404
      %v406 = vmul.f32 %v405, %v402
      %v407 = vstv %s403
      %v408 = vadd.f32 %v407, %v406
      %s409 = sld [smem:[#allocation5]]
      %s410 = sld [smem:[#allocation4]]
      %v411 = vstv %s410
      %v412 = vmul.f32 %v411, %v402
      %v413 = vstv %s409
      %v414 = vadd.f32 %v413, %v412
      %s415 = sld [smem:[#allocation7]]
      %s416 = sld [smem:[#allocation6]]
      %v417 = vstv %s416
      %v418 = vmul.f32 %v417, %v402
      %v419 = vstv %s415
      %v420 = vadd.f32 %v419, %v418
      %421 = vst [vmem:[%s394] sm:$0x3] %v408
      %422 = vst [vmem:[%s401] sm:$0x3] %v414
      %v423 = vmax.f32 %v420, 0.0
      %v424 = vsub.f32 0.0, %v423
      %v425 = vmul.f32 %v424, 1.442695
      %v426 = vpow.pop %v425
      %v427 = vadd.f32 %v426, 1.0
      %v428 = vrcp.pop %v427
      %429 = vst [vmem:[%s387] sm:$0x3] %v428
      %p430 = scmp.lt.s32.totalorder %s31, 1
      %s431 = scalar_select %p430, %s31, 1
      %p432 = scmp.lt.s32.totalorder %s32, 0
      %s433 = scalar_select %p432, %s32, 0
      %s434 = sadd.s32 %s433, %s431
      %s435 = smul.addr %s434, 2
      %s436 = scalar_lea.vmem %s7, %s435
      %p437 = scmp.lt.s32.totalorder %s31, 1
      %s438 = scalar_select %p437, %s31, 1
      %p439 = scmp.lt.s32.totalorder %s32, 0
      %s440 = scalar_select %p439, %s32, 0
      %s441 = sadd.s32 %s440, %s438
      %s442 = smul.addr %s441, 2
      %s443 = scalar_lea.vmem %s8, %s442
      %p444 = scmp.lt.s32.totalorder %s31, 1
      %s445 = scalar_select %p444, %s31, 1
      %p446 = scmp.lt.s32.totalorder %s32, 0
      %s447 = scalar_select %p446, %s32, 0
      %s448 = sadd.s32 %s447, %s445
      %s449 = smul.addr %s448, 2
      %s450 = scalar_lea.vmem %s9, %s449
      // Predicated region
      $region49: #{student_net_forward.1} parent=47 // pred_check
        %p451 = pneg %p213
      $region50: #{student_net_forward.1} parent=47 // pred_check_branch
        %453 = sbr.rel (%p451) target = $region52
      $region51: #{student_net_forward.1} parent=47 // pred_region
        _
      $region52: #{student_net_forward.1} parent=47 // pred_fallthru
        _
      // Predicated region
      $region53: #{student_net_forward.1} parent=47 // pred_check
        %p454 = pneg %p241
      $region54: #{student_net_forward.1} parent=47 // pred_check_branch
        %456 = sbr.rel (%p454) target = $region56
      $region55: #{student_net_forward.1} parent=47 // pred_region
        _
      $region56: #{student_net_forward.1} parent=47 // pred_fallthru
        _
      // Predicated region
      $region57: #{student_net_forward.1} parent=47 // pred_check
        %p457 = pneg %p269
      $region58: #{student_net_forward.1} parent=47 // pred_check_branch
        %459 = sbr.rel (%p457) target = $region60
      $region59: #{student_net_forward.1} parent=47 // pred_region
        _
      $region60: #{student_net_forward.1} parent=47 // pred_fallthru
        _
    $region48: #{student_net_forward.1} parent=5 // pred_fallthru
      _
    %p460 = scmp.le.s32.totalorder 2, %s22
    // Predicated region
    $region61: #{student_net_forward.1} parent=5 // pred_check
      %p461 = pneg %p460
    $region62: #{student_net_forward.1} parent=5 // pred_check_branch
      %463 = sbr.rel (%p461) target = $region64
    $region63: #{student_net_forward.1} parent=5 // pred_region
      %s464 = ssub.s32 %s22, 2
      // Predicated region
      $region65: #{student_net_forward.1} parent=63 // pred_check
        %p465 = pneg %p219
      $region66: #{student_net_forward.1} parent=63 // pred_check_branch
        %467 = sbr.rel (%p465) target = $region68
      $region67: #{student_net_forward.1} parent=63 // pred_region
        %p468 = scmp.lt.s32.totalorder %s33, 1
        %s469 = scalar_select %p468, %s33, 1
        %p470 = scmp.lt.s32.totalorder %s34, 0
        %s471 = scalar_select %p470, %s34, 0
        %s472 = sadd.s32 %s471, %s469
        %s473 = smul.addr %s472, 2
        %s474 = scalar_lea.vmem %s7, %s473
      $region68: #{student_net_forward.1} parent=63 // pred_fallthru
        _
      // Predicated region
      $region69: #{student_net_forward.1} parent=63 // pred_check
        %p475 = pneg %p247
      $region70: #{student_net_forward.1} parent=63 // pred_check_branch
        %477 = sbr.rel (%p475) target = $region72
      $region71: #{student_net_forward.1} parent=63 // pred_region
        %p478 = scmp.lt.s32.totalorder %s33, 1
        %s479 = scalar_select %p478, %s33, 1
        %p480 = scmp.lt.s32.totalorder %s34, 0
        %s481 = scalar_select %p480, %s34, 0
        %s482 = sadd.s32 %s481, %s479
        %s483 = smul.addr %s482, 2
        %s484 = scalar_lea.vmem %s8, %s483
      $region72: #{student_net_forward.1} parent=63 // pred_fallthru
        _
      // Predicated region
      $region73: #{student_net_forward.1} parent=63 // pred_check
        %p485 = pneg %p275
      $region74: #{student_net_forward.1} parent=63 // pred_check_branch
        %487 = sbr.rel (%p485) target = $region76
      $region75: #{student_net_forward.1} parent=63 // pred_region
        %p488 = scmp.lt.s32.totalorder %s33, 1
        %s489 = scalar_select %p488, %s33, 1
        %p490 = scmp.lt.s32.totalorder %s34, 0
        %s491 = scalar_select %p490, %s34, 0
        %s492 = sadd.s32 %s491, %s489
        %s493 = smul.addr %s492, 2
        %s494 = scalar_lea.vmem %s9, %s493
      $region76: #{student_net_forward.1} parent=63 // pred_fallthru
        _
    $region64: #{student_net_forward.1} parent=5 // pred_fallthru
      _
  $region6: #{student_net_forward.1} parent=0 // loop_footer
    %s26 = sadd.s32 1, %s22
  $region7: #{student_net_forward.1} parent=0 // loop_footer_branch
    %21 = sbr.rel target = $region3
  $region8: #{student_net_forward.1} parent=0 // loop_exit
    _

</llo_original>
